<compile_context>
chip_gen: v7x
topology: tpu7x:2x2x1
jax: 0.10.0
libtpu: 0.0.40
codegen_flags: <defaults>
</compile_context>

<pallas_src>
import functools

import jax
import jax.numpy as jnp
from jax.experimental import pallas as pl
from jax.experimental.pallas import tpu as pltpu


def _round_up(x, m):
    return ((x + m - 1) // m) * m


def _padded_tile_bytes(shape, itemsize=4):
    """VMEM footprint of a 2-D(+leading) tile after (8,128) padding."""
    sub = _round_up(shape[-2], 8) if len(shape) >= 2 else 1
    lane = _round_up(shape[-1], 128)
    lead = 1
    for d in shape[:-2]:
        lead *= d
    return lead * sub * lane * itemsize


def _fasttext_counts_kernel(ids_ref, emb_ref, wt_ref, bias_ref, out_ref, *,
                            vocab_pad, inv_seq_len):
    # ids_ref:  [s_pad, tb]      int32  (seq on sublanes, batch tile on lanes;
    #                                    padded seq rows hold the sentinel
    #                                    `vocab_pad`, which never matches)
    # emb_ref:  [vocab_pad, d_pad] f32  (embedding table, zero padded)
    # wt_ref:   [d_pad, o_pad]   f32  (fc weight, pre-transposed, zero padded)
    # bias_ref: [1, o_pad]       f32
    # out_ref:  [tb, o_pad]      f32
    s_pad, tb = ids_ref.shape

    # Vocab iota down the sublane axis; counts live as [vocab_pad, tb] so the
    # per-row one-hot is a cheap sublane broadcast + compare (no relayout).
    iota = jax.lax.broadcasted_iota(jnp.int32, (vocab_pad, tb), 0)

    def chunk_body(i, counts):
        base = pl.multiple_of(i * 8, 8)            # aligned sublane slice
        rows = ids_ref[pl.ds(base, 8), :]          # [8, tb] int32
        for r in range(8):                         # static unroll within chunk
            counts = counts + (rows[r:r + 1, :] == iota).astype(jnp.float32)
        return counts

    counts = jax.lax.fori_loop(
        0, s_pad // 8, chunk_body,
        jnp.zeros((vocab_pad, tb), jnp.float32))   # [vocab_pad, tb]

    # pooled[b, d] = (1/S) * sum_v counts[v, b] * E[v, d]
    pooled = jax.lax.dot_general(
        counts, emb_ref[...],
        dimension_numbers=(((0,), (0,)), ((), ())),
        preferred_element_type=jnp.float32) * inv_seq_len      # [tb, d_pad]

    out_ref[...] = (
        jnp.dot(pooled, wt_ref[...], preferred_element_type=jnp.float32)
        + bias_ref[...])


def fasttext_forward(text, emb_table, fc_weight, fc_bias, *, max_tb=128):
    """text: [seq_len, batch] int token ids; returns [batch, output_dim] f32."""
    seq_len, batch = text.shape
    vocab, emb_dim = emb_table.shape
    output_dim = fc_weight.shape[0]

    # ---- lane-dense padded sizes -----------------------------------------
    v_pad = _round_up(vocab, 128)
    d_pad = _round_up(emb_dim, 128)
    o_pad = _round_up(output_dim, 128)
    s_pad = _round_up(seq_len, 8)

    # ---- batch tiling ------------------------------------------------------
    # Batch rides the 128-lane axis of the ids block, so tiles are either the
    # full (small) batch or 128-wide.  batch > 128 => >=2 tiles on the
    # "parallel" grid axis (v7x megacore sharding).
    if batch > max_tb:
        tb = max_tb                      # multiple of 128
        b_pad = _round_up(batch, tb)
    else:
        tb = batch                       # block dim == full array dim: legal
        b_pad = batch

    # ---- inputs ------------------------------------------------------------
    ids = text.astype(jnp.int32)
    if (s_pad, b_pad) != (seq_len, batch):
        # Sentinel `v_pad` is outside [0, v_pad) so padded positions match no
        # one-hot row and contribute nothing; the mean divisor stays the
        # original seq_len.  Padded batch columns are sliced off at the end.
        ids = jnp.pad(ids, ((0, s_pad - seq_len), (0, b_pad - batch)),
                      constant_values=v_pad)

    emb_p = jnp.zeros((v_pad, d_pad), jnp.float32)
    emb_p = emb_p.at[:vocab, :emb_dim].set(emb_table.astype(jnp.float32))
    wt_p = jnp.zeros((d_pad, o_pad), jnp.float32)
    wt_p = wt_p.at[:emb_dim, :output_dim].set(fc_weight.T.astype(jnp.float32))
    bias_p = jnp.zeros((1, o_pad), jnp.float32)
    bias_p = bias_p.at[:, :output_dim].set(fc_bias.astype(jnp.float32))

    # ---- VMEM budget (real, padding-aware footprint) -----------------------
    vmem_limit = 48 << 20            # fits v5e/v6e (128 MiB) and v7x (64 MiB)
    vmem_needed = (
        2 * _padded_tile_bytes((s_pad, tb))        # ids block (double-buffered)
        + 2 * _padded_tile_bytes((v_pad, d_pad))   # embedding table
        + 2 * _padded_tile_bytes((d_pad, o_pad))   # fc weight^T
        + 2 * _padded_tile_bytes((1, o_pad))       # bias
        + 2 * _padded_tile_bytes((tb, o_pad))      # output block
        + _padded_tile_bytes((v_pad, tb))          # counts carry
        + _padded_tile_bytes((tb, d_pad))          # pooled
    )
    assert vmem_needed < vmem_limit, (
        f"VMEM footprint {vmem_needed} B exceeds {vmem_limit} B; "
        "tile the seq/vocab axes (see TODO at top of file).")

    grid = (b_pad // tb,)
    kernel = functools.partial(_fasttext_counts_kernel,
                               vocab_pad=v_pad,
                               inv_seq_len=1.0 / seq_len)

    out = pl.pallas_call(
        kernel,
        out_shape=jax.ShapeDtypeStruct((b_pad, o_pad), jnp.float32),
        grid_spec=pltpu.PrefetchScalarGridSpec(
            num_scalar_prefetch=0,
            grid=grid,
            in_specs=[
                pl.BlockSpec((s_pad, tb), lambda bi: (0, bi)),
                pl.BlockSpec((v_pad, d_pad), lambda bi: (0, 0)),
                pl.BlockSpec((d_pad, o_pad), lambda bi: (0, 0)),
                pl.BlockSpec((1, o_pad), lambda bi: (0, 0)),
            ],
            out_specs=pl.BlockSpec((tb, o_pad), lambda bi: (bi, 0)),
        ),
        compiler_params=pltpu.CompilerParams(
            dimension_semantics=("parallel",),
            vmem_limit_bytes=vmem_limit,
        ),
    )(ids, emb_p, wt_p, bias_p)

    return out[:batch, :output_dim]


def reference_forward(text, emb_table, fc_weight, fc_bias):
    """Pure-JAX reference matching the PyTorch module."""
    embedded = jnp.take(emb_table, text, axis=0)          # [S, B, D]
    pooled = jnp.mean(embedded, axis=0)                    # [B, D]
    return pooled @ fc_weight.T + fc_bias                  # [B, O]


if __name__ == "__main__":
    vocab_size = 100
    embedding_dim = 32
    output_dim = 4
    pad_idx = 0

    key = jax.random.PRNGKey(0)
    k_emb, k_w, k_b, k_txt = jax.random.split(key, 4)

    # nn.Embedding default init: N(0, 1); padding_idx row zeroed.
    emb_table = jax.random.normal(k_emb, (vocab_size, embedding_dim),
                                  dtype=jnp.float32)
    emb_table = emb_table.at[pad_idx].set(0.0)

    # nn.Linear default init: U(-1/sqrt(in), 1/sqrt(in)).
    bound = 1.0 / (embedding_dim ** 0.5)
    fc_weight = jax.random.uniform(k_w, (output_dim, embedding_dim),
                                   minval=-bound, maxval=bound,
                                   dtype=jnp.float32)
    fc_bias = jax.random.uniform(k_b, (output_dim,),
                                 minval=-bound, maxval=bound,
                                 dtype=jnp.float32)

    # --- test 1: tiny shape, single batch tile, seq multiple of 8 ----------
    seq_len, batch = 8, 2
    text = jax.random.randint(k_txt, (seq_len, batch), 0, vocab_size,
                              dtype=jnp.int32)
    text = text.at[-2:, :].set(pad_idx)

    out = jax.block_until_ready(
        fasttext_forward(text, emb_table, fc_weight, fc_bias))
    ref = reference_forward(text, emb_table, fc_weight, fc_bias)
    assert out.shape == (batch, output_dim)
    # 2e-5: the counts regrouping reorders f32 additions vs. the reference.
    assert jnp.allclose(out, ref, atol=2e-5, rtol=1e-5)

    # --- test 2: seq not a multiple of 8 (sentinel padding), batch > 128
    #             (two 128-wide batch tiles + batch padding; the parallel
    #             grid axis has >=2 tiles -> v7x megacore sharding).
    seq_len2, batch2 = 25, 130
    k_txt2 = jax.random.fold_in(k_txt, 1)
    text2 = jax.random.randint(k_txt2, (seq_len2, batch2), 0, vocab_size,
                               dtype=jnp.int32)
    text2 = text2.at[-3:, :].set(pad_idx)

    out2 = jax.block_until_ready(
        fasttext_forward(text2, emb_table, fc_weight, fc_bias))
    ref2 = reference_forward(text2, emb_table, fc_weight, fc_bias)
    assert out2.shape == (batch2, output_dim)
    assert jnp.allclose(out2, ref2, atol=2e-5, rtol=1e-5)

    print("KERNEL_OK")
</pallas_src>

<mosaic_0001>
module attributes {stable_mosaic.version = 11 : i64} {
  func.func @_fasttext_counts_kernel(%arg0: i32, %arg1: memref<8x2xi32, #tpu.memory_space<vmem>>, %arg2: memref<128x128xf32, #tpu.memory_space<vmem>>, %arg3: memref<128x128xf32, #tpu.memory_space<vmem>>, %arg4: memref<1x128xf32, #tpu.memory_space<vmem>>, %arg5: memref<2x128xf32, #tpu.memory_space<vmem>>) attributes {dimension_semantics = [#tpu.dimension_semantics<parallel>], iteration_bounds = array<i64: 1>, scalar_prefetch = 0 : i64, scratch_operands = 0 : i64, tpu.core_type = #tpu.core_type<tc>, window_params = [{transform_indices = @transform_0, window_bounds = array<i64: 8, 2>}, {pipeline_mode = #tpu.pipeline_mode<synchronous>, transform_indices = @transform_1, window_bounds = array<i64: 128, 128>}, {pipeline_mode = #tpu.pipeline_mode<synchronous>, transform_indices = @transform_2, window_bounds = array<i64: 128, 128>}, {pipeline_mode = #tpu.pipeline_mode<synchronous>, transform_indices = @transform_3, window_bounds = array<i64: 1, 128>}, {transform_indices = @transform_4, window_bounds = array<i64: 2, 128>}]} {
    %0 = tpu.iota {dimensions = array<i32: 0>} : vector<128x2xi32>
    %cst = arith.constant 0.000000e+00 : f32
    %1 = vector.broadcast %cst : f32 to vector<128x2xf32>
    %c0_i32 = arith.constant 0 : i32
    %c8_i32 = arith.constant 8 : i32
    %2 = arith.muli %c0_i32, %c8_i32 : i32
    %3 = tpu.assume_multiple %2, 8 : i32
    %4 = arith.index_cast %3 : i32 to index
    %c0 = arith.constant 0 : index
    %5 = vector.load %arg1[%4, %c0] : memref<8x2xi32, #tpu.memory_space<vmem>>, vector<8x2xi32>
    %6 = vector.extract_strided_slice %5 {offsets = [0, 0], sizes = [1, 2], strides = [1, 1]} : vector<8x2xi32> to vector<1x2xi32>
    %7 = vector.broadcast %6 : vector<1x2xi32> to vector<128x2xi32>
    %8 = arith.cmpi eq, %7, %0 : vector<128x2xi32>
    %9 = arith.extui %8 : vector<128x2xi1> to vector<128x2xi32>
    %10 = arith.sitofp %9 : vector<128x2xi32> to vector<128x2xf32>
    %11 = arith.addf %1, %10 : vector<128x2xf32>
    %12 = vector.extract_strided_slice %5 {offsets = [1, 0], sizes = [1, 2], strides = [1, 1]} : vector<8x2xi32> to vector<1x2xi32>
    %13 = vector.broadcast %12 : vector<1x2xi32> to vector<128x2xi32>
    %14 = arith.cmpi eq, %13, %0 : vector<128x2xi32>
    %15 = arith.extui %14 : vector<128x2xi1> to vector<128x2xi32>
    %16 = arith.sitofp %15 : vector<128x2xi32> to vector<128x2xf32>
    %17 = arith.addf %11, %16 : vector<128x2xf32>
    %18 = vector.extract_strided_slice %5 {offsets = [2, 0], sizes = [1, 2], strides = [1, 1]} : vector<8x2xi32> to vector<1x2xi32>
    %19 = vector.broadcast %18 : vector<1x2xi32> to vector<128x2xi32>
    %20 = arith.cmpi eq, %19, %0 : vector<128x2xi32>
    %21 = arith.extui %20 : vector<128x2xi1> to vector<128x2xi32>
    %22 = arith.sitofp %21 : vector<128x2xi32> to vector<128x2xf32>
    %23 = arith.addf %17, %22 : vector<128x2xf32>
    %24 = vector.extract_strided_slice %5 {offsets = [3, 0], sizes = [1, 2], strides = [1, 1]} : vector<8x2xi32> to vector<1x2xi32>
    %25 = vector.broadcast %24 : vector<1x2xi32> to vector<128x2xi32>
    %26 = arith.cmpi eq, %25, %0 : vector<128x2xi32>
    %27 = arith.extui %26 : vector<128x2xi1> to vector<128x2xi32>
    %28 = arith.sitofp %27 : vector<128x2xi32> to vector<128x2xf32>
    %29 = arith.addf %23, %28 : vector<128x2xf32>
    %30 = vector.extract_strided_slice %5 {offsets = [4, 0], sizes = [1, 2], strides = [1, 1]} : vector<8x2xi32> to vector<1x2xi32>
    %31 = vector.broadcast %30 : vector<1x2xi32> to vector<128x2xi32>
    %32 = arith.cmpi eq, %31, %0 : vector<128x2xi32>
    %33 = arith.extui %32 : vector<128x2xi1> to vector<128x2xi32>
    %34 = arith.sitofp %33 : vector<128x2xi32> to vector<128x2xf32>
    %35 = arith.addf %29, %34 : vector<128x2xf32>
    %36 = vector.extract_strided_slice %5 {offsets = [5, 0], sizes = [1, 2], strides = [1, 1]} : vector<8x2xi32> to vector<1x2xi32>
    %37 = vector.broadcast %36 : vector<1x2xi32> to vector<128x2xi32>
    %38 = arith.cmpi eq, %37, %0 : vector<128x2xi32>
    %39 = arith.extui %38 : vector<128x2xi1> to vector<128x2xi32>
    %40 = arith.sitofp %39 : vector<128x2xi32> to vector<128x2xf32>
    %41 = arith.addf %35, %40 : vector<128x2xf32>
    %42 = vector.extract_strided_slice %5 {offsets = [6, 0], sizes = [1, 2], strides = [1, 1]} : vector<8x2xi32> to vector<1x2xi32>
    %43 = vector.broadcast %42 : vector<1x2xi32> to vector<128x2xi32>
    %44 = arith.cmpi eq, %43, %0 : vector<128x2xi32>
    %45 = arith.extui %44 : vector<128x2xi1> to vector<128x2xi32>
    %46 = arith.sitofp %45 : vector<128x2xi32> to vector<128x2xf32>
    %47 = arith.addf %41, %46 : vector<128x2xf32>
    %48 = vector.extract_strided_slice %5 {offsets = [7, 0], sizes = [1, 2], strides = [1, 1]} : vector<8x2xi32> to vector<1x2xi32>
    %49 = vector.broadcast %48 : vector<1x2xi32> to vector<128x2xi32>
    %50 = arith.cmpi eq, %49, %0 : vector<128x2xi32>
    %51 = arith.extui %50 : vector<128x2xi1> to vector<128x2xi32>
    %52 = arith.sitofp %51 : vector<128x2xi32> to vector<128x2xf32>
    %53 = arith.addf %47, %52 : vector<128x2xf32>
    %c1_i32 = arith.constant 1 : i32
    %c0_0 = arith.constant 0 : index
    %c0_1 = arith.constant 0 : index
    %54 = vector.load %arg2[%c0_0, %c0_1] : memref<128x128xf32, #tpu.memory_space<vmem>>, vector<128x128xf32>
    %cst_2 = arith.constant dense<0.000000e+00> : vector<2x128xf32>
    %55 = tpu.matmul %53, %54, %cst_2 {dimension_numbers = #tpu.dot_dimension_numbers<[0], [0], [1], [1], [0, 1, 1, 1], [], []>} : vector<128x2xf32>, vector<128x128xf32>, vector<2x128xf32> -> vector<2x128xf32>
    %cst_3 = arith.constant 1.250000e-01 : f32
    %56 = vector.broadcast %cst_3 : f32 to vector<2x128xf32>
    %57 = arith.mulf %55, %56 : vector<2x128xf32>
    %c0_4 = arith.constant 0 : index
    %c0_5 = arith.constant 0 : index
    %58 = vector.load %arg3[%c0_4, %c0_5] : memref<128x128xf32, #tpu.memory_space<vmem>>, vector<128x128xf32>
    %cst_6 = arith.constant dense<0.000000e+00> : vector<2x128xf32>
    %59 = tpu.matmul %57, %58, %cst_6 {dimension_numbers = #tpu.dot_dimension_numbers<[1], [0], [0], [1], [0, 0, 1, 1], [], []>} : vector<2x128xf32>, vector<128x128xf32>, vector<2x128xf32> -> vector<2x128xf32>
    %c0_7 = arith.constant 0 : index
    %c0_8 = arith.constant 0 : index
    %60 = vector.load %arg4[%c0_7, %c0_8] : memref<1x128xf32, #tpu.memory_space<vmem>>, vector<1x128xf32>
    %61 = vector.broadcast %60 : vector<1x128xf32> to vector<2x128xf32>
    %62 = arith.addf %59, %61 : vector<2x128xf32>
    %c0_9 = arith.constant 0 : index
    %c0_10 = arith.constant 0 : index
    %63 = vector.load %arg5[%c0_9, %c0_10] : memref<2x128xf32, #tpu.memory_space<vmem>>, vector<2x128xf32>
    tpu.vector_store %arg5[%c0_9, %c0_10], %62 {strides = array<i32>} : memref<2x128xf32, #tpu.memory_space<vmem>>, vector<2x128xf32>,
    return
  }
  func.func @transform_0(%arg0: i32) -> (i32, i32) {
    %c0_i32 = arith.constant 0 : i32
    %c0_i32_0 = arith.constant 0 : i32
    return %c0_i32, %arg0 : i32, i32
  }
  func.func @transform_1(%arg0: i32) -> (i32, i32) {
    %c0_i32 = arith.constant 0 : i32
    %c0_i32_0 = arith.constant 0 : i32
    %c0_i32_1 = arith.constant 0 : i32
    return %c0_i32, %c0_i32_0 : i32, i32
  }
  func.func @transform_2(%arg0: i32) -> (i32, i32) {
    %c0_i32 = arith.constant 0 : i32
    %c0_i32_0 = arith.constant 0 : i32
    %c0_i32_1 = arith.constant 0 : i32
    return %c0_i32, %c0_i32_0 : i32, i32
  }
  func.func @transform_3(%arg0: i32) -> (i32, i32) {
    %c0_i32 = arith.constant 0 : i32
    %c0_i32_0 = arith.constant 0 : i32
    %c0_i32_1 = arith.constant 0 : i32
    return %c0_i32, %c0_i32_0 : i32, i32
  }
  func.func @transform_4(%arg0: i32) -> (i32, i32) {
    %c0_i32 = arith.constant 0 : i32
    %c0_i32_0 = arith.constant 0 : i32
    return %arg0, %c0_i32 : i32, i32
  }
}

</mosaic_0001>

<llo_original>
// kernel: tpu_custom_call.1
$region0: #{tpu_custom_call.1}
  #allocation0 [shape = 'u32[]', space=smem, size = 0x4, offset = 0x4, fixed_abs, tag = 'smem constant byte address 0x4 - core index']
  #allocation1 [shape = 'u32[144,128]{1,0:T(1,128)}', space=vmem, size = 0x12000, scoped, tag = 'internal scratch']
  %s0 = inlined_call_operand.vmem [shape: s32[8,2], index: 0, kind: input, shape index: {}]
  %s1 = inlined_call_operand.hbm [shape: f32[128,128], index: 1, kind: input, shape index: {}]
  %s2 = inlined_call_operand.hbm [shape: f32[128,128], index: 2, kind: input, shape index: {}]
  %s3 = inlined_call_operand.vmem [shape: f32[1,128], index: 3, kind: input, shape index: {}]
  %s4 = inlined_call_operand.hbm [shape: f32[2,128], index: 4, kind: output, shape index: {}]
  %s5 = sld [smem:[#allocation0]]
  $region34: #{tpu_custom_call.1} parent=0
    _
  %s7 = ssub.s32 1, %s5
  %s8 = scalar_select 0, %s7, %s5
  $region1: #{tpu_custom_call.1} parent=0
    #allocation2 [shape = 'u8[65536]{0}', space=vmem, size = 0x10000, scoped, tag = 'input window, operand 1, single buffered']
    #allocation3 [shape = 's32[1]{0}', space=sflag, size = 0x4, scoped, tag = 'scoped memory for tpu_custom_call.1']
    #allocation4 [shape = 's32[1]{0}', space=sflag, size = 0x4, scoped, tag = 'scoped memory for tpu_custom_call.1']
    #allocation5 [shape = 'u8[65536]{0}', space=vmem, size = 0x10000, scoped, tag = 'input window, operand 2, single buffered']
    #allocation6 [shape = 's32[1]{0}', space=sflag, size = 0x4, scoped, tag = 'scoped memory for tpu_custom_call.1']
    #allocation7 [shape = 'u8[1024]{0}', space=vmem, size = 0x400, scoped, tag = 'output window, operand 0, single buffered']
    %9 = vsyncpa [#allocation3], 0
    %10 = vsyncpa [#allocation6], 0
    %11 = vsyncpa [#allocation4], 0
    // Predicated region
    $region2: #{tpu_custom_call.1} parent=1 // pred_check
      _
    $region3: #{tpu_custom_call.1} parent=1 // pred_check_branch
      %13 = sbr.rel (0) target = $region5
    $region4: #{tpu_custom_call.1} parent=1 // pred_region
      _
    $region5: #{tpu_custom_call.1} parent=1 // pred_fallthru
      _
    // Predicated region
    $region6: #{tpu_custom_call.1} parent=1 // pred_check
      _
    $region7: #{tpu_custom_call.1} parent=1 // pred_check_branch
      %15 = sbr.rel (0) target = $region9
    $region8: #{tpu_custom_call.1} parent=1 // pred_region
      %s17 = ssub.s32 2048, 2048
      %18 = vsyncadd [#allocation3], %s17
      %s19 = sshll.u32 [#allocation2], 4
      %s20 = int_to_ptr.vmem [resolvable:$true] %s19
      %25 = dma.hbm_to_vmem [thread:$0]  %s1, 2048, %s20, [#allocation3], 128, 128, 8
    $region9: #{tpu_custom_call.1} parent=1 // pred_fallthru
      _
    // Predicated region
    $region10: #{tpu_custom_call.1} parent=1 // pred_check
      _
    $region11: #{tpu_custom_call.1} parent=1 // pred_check_branch
      %27 = sbr.rel (0) target = $region13
    $region12: #{tpu_custom_call.1} parent=1 // pred_region
      %s29 = ssub.s32 2048, 2048
      %30 = vsyncadd [#allocation6], %s29
      %s31 = sshll.u32 [#allocation5], 4
      %s32 = int_to_ptr.vmem [resolvable:$true] %s31
      %37 = dma.hbm_to_vmem [thread:$0]  %s2, 2048, %s32, [#allocation6], 128, 128, 8
    $region13: #{tpu_custom_call.1} parent=1 // pred_fallthru
      _
    // Predicated region
    $region14: #{tpu_custom_call.1} parent=1 // pred_check
      _
    $region15: #{tpu_custom_call.1} parent=1 // pred_check_branch
      %39 = sbr.rel (0) target = $region17
    $region16: #{tpu_custom_call.1} parent=1 // pred_region
      _
    $region17: #{tpu_custom_call.1} parent=1 // pred_fallthru
      _
    // Predicated region
    $region18: #{tpu_custom_call.1} parent=1 // pred_check
      _
    $region19: #{tpu_custom_call.1} parent=1 // pred_check_branch
      %41 = sbr.rel (0) target = $region21
    $region20: #{tpu_custom_call.1} parent=1 // pred_region
      %42 = dma.done [#allocation3], 2048
    $region21: #{tpu_custom_call.1} parent=1 // pred_fallthru
      _
    // Predicated region
    $region22: #{tpu_custom_call.1} parent=1 // pred_check
      _
    $region23: #{tpu_custom_call.1} parent=1 // pred_check_branch
      %44 = sbr.rel (0) target = $region25
    $region24: #{tpu_custom_call.1} parent=1 // pred_region
      %45 = dma.done [#allocation6], 2048
    $region25: #{tpu_custom_call.1} parent=1 // pred_fallthru
      _
    %v46 = vlaneseq
    %v47 = vshrl.u32 %v46, 7
    %v48 = vadd.s32 %v47, 8
    %v49 = vadd.s32 %v47, 16
    %v50 = vadd.s32 %v47, 24
    %v51 = vadd.s32 %v47, 32
    %v52 = vadd.s32 %v47, 40
    %v53 = vadd.s32 %v47, 48
    %v54 = vadd.s32 %v47, 56
    %v55 = vadd.s32 %v47, 64
    %v56 = vadd.s32 %v47, 72
    %v57 = vadd.s32 %v47, 80
    %v58 = vadd.s32 %v47, 88
    %v59 = vadd.s32 %v47, 96
    %v60 = vadd.s32 %v47, 104
    %v61 = vadd.s32 %v47, 112
    %v62 = vadd.s32 %v47, 120
    %v63 = vld [vmem:[%s0] sm:$0xff]
    %v64 = vlaneseq
    %v65 = vshrl.u32 %v64, 7
    %v66 = vsub.s32 0, %v65
    %v67 = vrot.slane %v63, %v66
    %vm68 = vcmp.eq.s32.totalorder %v67, %v47
    %vm69 = vcmp.eq.s32.totalorder %v67, %v48
    %vm70 = vcmp.eq.s32.totalorder %v67, %v49
    %vm71 = vcmp.eq.s32.totalorder %v67, %v50
    %vm72 = vcmp.eq.s32.totalorder %v67, %v51
    %vm73 = vcmp.eq.s32.totalorder %v67, %v52
    %vm74 = vcmp.eq.s32.totalorder %v67, %v53
    %vm75 = vcmp.eq.s32.totalorder %v67, %v54
    %vm76 = vcmp.eq.s32.totalorder %v67, %v55
    %vm77 = vcmp.eq.s32.totalorder %v67, %v56
    %vm78 = vcmp.eq.s32.totalorder %v67, %v57
    %vm79 = vcmp.eq.s32.totalorder %v67, %v58
    %vm80 = vcmp.eq.s32.totalorder %v67, %v59
    %vm81 = vcmp.eq.s32.totalorder %v67, %v60
    %vm82 = vcmp.eq.s32.totalorder %v67, %v61
    %vm83 = vcmp.eq.s32.totalorder %v67, %v62
    %v84 = vsel %vm68, 1, 0
    %v85 = vsel %vm69, 1, 0
    %v86 = vsel %vm70, 1, 0
    %v87 = vsel %vm71, 1, 0
    %v88 = vsel %vm72, 1, 0
    %v89 = vsel %vm73, 1, 0
    %v90 = vsel %vm74, 1, 0
    %v91 = vsel %vm75, 1, 0
    %v92 = vsel %vm76, 1, 0
    %v93 = vsel %vm77, 1, 0
    %v94 = vsel %vm78, 1, 0
    %v95 = vsel %vm79, 1, 0
    %v96 = vsel %vm80, 1, 0
    %v97 = vsel %vm81, 1, 0
    %v98 = vsel %vm82, 1, 0
    %v99 = vsel %vm83, 1, 0
    %v100 = vcvt.s32.f32 %v84
    %v101 = vcvt.s32.f32 %v85
    %v102 = vcvt.s32.f32 %v86
    %v103 = vcvt.s32.f32 %v87
    %v104 = vcvt.s32.f32 %v88
    %v105 = vcvt.s32.f32 %v89
    %v106 = vcvt.s32.f32 %v90
    %v107 = vcvt.s32.f32 %v91
    %v108 = vcvt.s32.f32 %v92
    %v109 = vcvt.s32.f32 %v93
    %v110 = vcvt.s32.f32 %v94
    %v111 = vcvt.s32.f32 %v95
    %v112 = vcvt.s32.f32 %v96
    %v113 = vcvt.s32.f32 %v97
    %v114 = vcvt.s32.f32 %v98
    %v115 = vcvt.s32.f32 %v99
    %v116 = vadd.f32 %v100, 0.0
    %v117 = vadd.f32 %v101, 0.0
    %v118 = vadd.f32 %v102, 0.0
    %v119 = vadd.f32 %v103, 0.0
    %v120 = vadd.f32 %v104, 0.0
    %v121 = vadd.f32 %v105, 0.0
    %v122 = vadd.f32 %v106, 0.0
    %v123 = vadd.f32 %v107, 0.0
    %v124 = vadd.f32 %v108, 0.0
    %v125 = vadd.f32 %v109, 0.0
    %v126 = vadd.f32 %v110, 0.0
    %v127 = vadd.f32 %v111, 0.0
    %v128 = vadd.f32 %v112, 0.0
    %v129 = vadd.f32 %v113, 0.0
    %v130 = vadd.f32 %v114, 0.0
    %v131 = vadd.f32 %v115, 0.0
    %v132 = vlaneseq
    %v133 = vshrl.u32 %v132, 7
    %v134 = vsub.s32 1, %v133
    %v135 = vrot.slane %v63, %v134
    %vm136 = vcmp.eq.s32.totalorder %v135, %v47
    %vm137 = vcmp.eq.s32.totalorder %v135, %v48
    %vm138 = vcmp.eq.s32.totalorder %v135, %v49
    %vm139 = vcmp.eq.s32.totalorder %v135, %v50
    %vm140 = vcmp.eq.s32.totalorder %v135, %v51
    %vm141 = vcmp.eq.s32.totalorder %v135, %v52
    %vm142 = vcmp.eq.s32.totalorder %v135, %v53
    %vm143 = vcmp.eq.s32.totalorder %v135, %v54
    %vm144 = vcmp.eq.s32.totalorder %v135, %v55
    %vm145 = vcmp.eq.s32.totalorder %v135, %v56
    %vm146 = vcmp.eq.s32.totalorder %v135, %v57
    %vm147 = vcmp.eq.s32.totalorder %v135, %v58
    %vm148 = vcmp.eq.s32.totalorder %v135, %v59
    %vm149 = vcmp.eq.s32.totalorder %v135, %v60
    %vm150 = vcmp.eq.s32.totalorder %v135, %v61
    %vm151 = vcmp.eq.s32.totalorder %v135, %v62
    %v152 = vsel %vm136, 1, 0
    %v153 = vsel %vm137, 1, 0
    %v154 = vsel %vm138, 1, 0
    %v155 = vsel %vm139, 1, 0
    %v156 = vsel %vm140, 1, 0
    %v157 = vsel %vm141, 1, 0
    %v158 = vsel %vm142, 1, 0
    %v159 = vsel %vm143, 1, 0
    %v160 = vsel %vm144, 1, 0
    %v161 = vsel %vm145, 1, 0
    %v162 = vsel %vm146, 1, 0
    %v163 = vsel %vm147, 1, 0
    %v164 = vsel %vm148, 1, 0
    %v165 = vsel %vm149, 1, 0
    %v166 = vsel %vm150, 1, 0
    %v167 = vsel %vm151, 1, 0
    %v168 = vcvt.s32.f32 %v152
    %v169 = vcvt.s32.f32 %v153
    %v170 = vcvt.s32.f32 %v154
    %v171 = vcvt.s32.f32 %v155
    %v172 = vcvt.s32.f32 %v156
    %v173 = vcvt.s32.f32 %v157
    %v174 = vcvt.s32.f32 %v158
    %v175 = vcvt.s32.f32 %v159
    %v176 = vcvt.s32.f32 %v160
    %v177 = vcvt.s32.f32 %v161
    %v178 = vcvt.s32.f32 %v162
    %v179 = vcvt.s32.f32 %v163
    %v180 = vcvt.s32.f32 %v164
    %v181 = vcvt.s32.f32 %v165
    %v182 = vcvt.s32.f32 %v166
    %v183 = vcvt.s32.f32 %v167
    %v184 = vadd.f32 %v116, %v168
    %v185 = vadd.f32 %v117, %v169
    %v186 = vadd.f32 %v118, %v170
    %v187 = vadd.f32 %v119, %v171
    %v188 = vadd.f32 %v120, %v172
    %v189 = vadd.f32 %v121, %v173
    %v190 = vadd.f32 %v122, %v174
    %v191 = vadd.f32 %v123, %v175
    %v192 = vadd.f32 %v124, %v176
    %v193 = vadd.f32 %v125, %v177
    %v194 = vadd.f32 %v126, %v178
    %v195 = vadd.f32 %v127, %v179
    %v196 = vadd.f32 %v128, %v180
    %v197 = vadd.f32 %v129, %v181
    %v198 = vadd.f32 %v130, %v182
    %v199 = vadd.f32 %v131, %v183
    %v200 = vlaneseq
    %v201 = vshrl.u32 %v200, 7
    %v202 = vsub.s32 2, %v201
    %v203 = vrot.slane %v63, %v202
    %vm204 = vcmp.eq.s32.totalorder %v203, %v47
    %vm205 = vcmp.eq.s32.totalorder %v203, %v48
    %vm206 = vcmp.eq.s32.totalorder %v203, %v49
    %vm207 = vcmp.eq.s32.totalorder %v203, %v50
    %vm208 = vcmp.eq.s32.totalorder %v203, %v51
    %vm209 = vcmp.eq.s32.totalorder %v203, %v52
    %vm210 = vcmp.eq.s32.totalorder %v203, %v53
    %vm211 = vcmp.eq.s32.totalorder %v203, %v54
    %vm212 = vcmp.eq.s32.totalorder %v203, %v55
    %vm213 = vcmp.eq.s32.totalorder %v203, %v56
    %vm214 = vcmp.eq.s32.totalorder %v203, %v57
    %vm215 = vcmp.eq.s32.totalorder %v203, %v58
    %vm216 = vcmp.eq.s32.totalorder %v203, %v59
    %vm217 = vcmp.eq.s32.totalorder %v203, %v60
    %vm218 = vcmp.eq.s32.totalorder %v203, %v61
    %vm219 = vcmp.eq.s32.totalorder %v203, %v62
    %v220 = vsel %vm204, 1, 0
    %v221 = vsel %vm205, 1, 0
    %v222 = vsel %vm206, 1, 0
    %v223 = vsel %vm207, 1, 0
    %v224 = vsel %vm208, 1, 0
    %v225 = vsel %vm209, 1, 0
    %v226 = vsel %vm210, 1, 0
    %v227 = vsel %vm211, 1, 0
    %v228 = vsel %vm212, 1, 0
    %v229 = vsel %vm213, 1, 0
    %v230 = vsel %vm214, 1, 0
    %v231 = vsel %vm215, 1, 0
    %v232 = vsel %vm216, 1, 0
    %v233 = vsel %vm217, 1, 0
    %v234 = vsel %vm218, 1, 0
    %v235 = vsel %vm219, 1, 0
    %v236 = vcvt.s32.f32 %v220
    %v237 = vcvt.s32.f32 %v221
    %v238 = vcvt.s32.f32 %v222
    %v239 = vcvt.s32.f32 %v223
    %v240 = vcvt.s32.f32 %v224
    %v241 = vcvt.s32.f32 %v225
    %v242 = vcvt.s32.f32 %v226
    %v243 = vcvt.s32.f32 %v227
    %v244 = vcvt.s32.f32 %v228
    %v245 = vcvt.s32.f32 %v229
    %v246 = vcvt.s32.f32 %v230
    %v247 = vcvt.s32.f32 %v231
    %v248 = vcvt.s32.f32 %v232
    %v249 = vcvt.s32.f32 %v233
    %v250 = vcvt.s32.f32 %v234
    %v251 = vcvt.s32.f32 %v235
    %v252 = vadd.f32 %v184, %v236
    %v253 = vadd.f32 %v185, %v237
    %v254 = vadd.f32 %v186, %v238
    %v255 = vadd.f32 %v187, %v239
    %v256 = vadd.f32 %v188, %v240
    %v257 = vadd.f32 %v189, %v241
    %v258 = vadd.f32 %v190, %v242
    %v259 = vadd.f32 %v191, %v243
    %v260 = vadd.f32 %v192, %v244
    %v261 = vadd.f32 %v193, %v245
    %v262 = vadd.f32 %v194, %v246
    %v263 = vadd.f32 %v195, %v247
    %v264 = vadd.f32 %v196, %v248
    %v265 = vadd.f32 %v197, %v249
    %v266 = vadd.f32 %v198, %v250
    %v267 = vadd.f32 %v199, %v251
    %v268 = vlaneseq
    %v269 = vshrl.u32 %v268, 7
    %v270 = vsub.s32 3, %v269
    %v271 = vrot.slane %v63, %v270
    %vm272 = vcmp.eq.s32.totalorder %v271, %v47
    %vm273 = vcmp.eq.s32.totalorder %v271, %v48
    %vm274 = vcmp.eq.s32.totalorder %v271, %v49
    %vm275 = vcmp.eq.s32.totalorder %v271, %v50
    %vm276 = vcmp.eq.s32.totalorder %v271, %v51
    %vm277 = vcmp.eq.s32.totalorder %v271, %v52
    %vm278 = vcmp.eq.s32.totalorder %v271, %v53
    %vm279 = vcmp.eq.s32.totalorder %v271, %v54
    %vm280 = vcmp.eq.s32.totalorder %v271, %v55
    %vm281 = vcmp.eq.s32.totalorder %v271, %v56
    %vm282 = vcmp.eq.s32.totalorder %v271, %v57
    %vm283 = vcmp.eq.s32.totalorder %v271, %v58
    %vm284 = vcmp.eq.s32.totalorder %v271, %v59
    %vm285 = vcmp.eq.s32.totalorder %v271, %v60
    %vm286 = vcmp.eq.s32.totalorder %v271, %v61
    %vm287 = vcmp.eq.s32.totalorder %v271, %v62
    %v288 = vsel %vm272, 1, 0
    %v289 = vsel %vm273, 1, 0
    %v290 = vsel %vm274, 1, 0
    %v291 = vsel %vm275, 1, 0
    %v292 = vsel %vm276, 1, 0
    %v293 = vsel %vm277, 1, 0
    %v294 = vsel %vm278, 1, 0
    %v295 = vsel %vm279, 1, 0
    %v296 = vsel %vm280, 1, 0
    %v297 = vsel %vm281, 1, 0
    %v298 = vsel %vm282, 1, 0
    %v299 = vsel %vm283, 1, 0
    %v300 = vsel %vm284, 1, 0
    %v301 = vsel %vm285, 1, 0
    %v302 = vsel %vm286, 1, 0
    %v303 = vsel %vm287, 1, 0
    %v304 = vcvt.s32.f32 %v288
    %v305 = vcvt.s32.f32 %v289
    %v306 = vcvt.s32.f32 %v290
    %v307 = vcvt.s32.f32 %v291
    %v308 = vcvt.s32.f32 %v292
    %v309 = vcvt.s32.f32 %v293
    %v310 = vcvt.s32.f32 %v294
    %v311 = vcvt.s32.f32 %v295
    %v312 = vcvt.s32.f32 %v296
    %v313 = vcvt.s32.f32 %v297
    %v314 = vcvt.s32.f32 %v298
    %v315 = vcvt.s32.f32 %v299
    %v316 = vcvt.s32.f32 %v300
    %v317 = vcvt.s32.f32 %v301
    %v318 = vcvt.s32.f32 %v302
    %v319 = vcvt.s32.f32 %v303
    %v320 = vadd.f32 %v252, %v304
    %v321 = vadd.f32 %v253, %v305
    %v322 = vadd.f32 %v254, %v306
    %v323 = vadd.f32 %v255, %v307
    %v324 = vadd.f32 %v256, %v308
    %v325 = vadd.f32 %v257, %v309
    %v326 = vadd.f32 %v258, %v310
    %v327 = vadd.f32 %v259, %v311
    %v328 = vadd.f32 %v260, %v312
    %v329 = vadd.f32 %v261, %v313
    %v330 = vadd.f32 %v262, %v314
    %v331 = vadd.f32 %v263, %v315
    %v332 = vadd.f32 %v264, %v316
    %v333 = vadd.f32 %v265, %v317
    %v334 = vadd.f32 %v266, %v318
    %v335 = vadd.f32 %v267, %v319
    %v336 = vlaneseq
    %v337 = vshrl.u32 %v336, 7
    %v338 = vsub.s32 4, %v337
    %v339 = vrot.slane %v63, %v338
    %vm340 = vcmp.eq.s32.totalorder %v339, %v47
    %vm341 = vcmp.eq.s32.totalorder %v339, %v48
    %vm342 = vcmp.eq.s32.totalorder %v339, %v49
    %vm343 = vcmp.eq.s32.totalorder %v339, %v50
    %vm344 = vcmp.eq.s32.totalorder %v339, %v51
    %vm345 = vcmp.eq.s32.totalorder %v339, %v52
    %vm346 = vcmp.eq.s32.totalorder %v339, %v53
    %vm347 = vcmp.eq.s32.totalorder %v339, %v54
    %vm348 = vcmp.eq.s32.totalorder %v339, %v55
    %vm349 = vcmp.eq.s32.totalorder %v339, %v56
    %vm350 = vcmp.eq.s32.totalorder %v339, %v57
    %vm351 = vcmp.eq.s32.totalorder %v339, %v58
    %vm352 = vcmp.eq.s32.totalorder %v339, %v59
    %vm353 = vcmp.eq.s32.totalorder %v339, %v60
    %vm354 = vcmp.eq.s32.totalorder %v339, %v61
    %vm355 = vcmp.eq.s32.totalorder %v339, %v62
    %v356 = vsel %vm340, 1, 0
    %v357 = vsel %vm341, 1, 0
    %v358 = vsel %vm342, 1, 0
    %v359 = vsel %vm343, 1, 0
    %v360 = vsel %vm344, 1, 0
    %v361 = vsel %vm345, 1, 0
    %v362 = vsel %vm346, 1, 0
    %v363 = vsel %vm347, 1, 0
    %v364 = vsel %vm348, 1, 0
    %v365 = vsel %vm349, 1, 0
    %v366 = vsel %vm350, 1, 0
    %v367 = vsel %vm351, 1, 0
    %v368 = vsel %vm352, 1, 0
    %v369 = vsel %vm353, 1, 0
    %v370 = vsel %vm354, 1, 0
    %v371 = vsel %vm355, 1, 0
    %v372 = vcvt.s32.f32 %v356
    %v373 = vcvt.s32.f32 %v357
    %v374 = vcvt.s32.f32 %v358
    %v375 = vcvt.s32.f32 %v359
    %v376 = vcvt.s32.f32 %v360
    %v377 = vcvt.s32.f32 %v361
    %v378 = vcvt.s32.f32 %v362
    %v379 = vcvt.s32.f32 %v363
    %v380 = vcvt.s32.f32 %v364
    %v381 = vcvt.s32.f32 %v365
    %v382 = vcvt.s32.f32 %v366
    %v383 = vcvt.s32.f32 %v367
    %v384 = vcvt.s32.f32 %v368
    %v385 = vcvt.s32.f32 %v369
    %v386 = vcvt.s32.f32 %v370
    %v387 = vcvt.s32.f32 %v371
    %v388 = vadd.f32 %v320, %v372
    %v389 = vadd.f32 %v321, %v373
    %v390 = vadd.f32 %v322, %v374
    %v391 = vadd.f32 %v323, %v375
    %v392 = vadd.f32 %v324, %v376
    %v393 = vadd.f32 %v325, %v377
    %v394 = vadd.f32 %v326, %v378
    %v395 = vadd.f32 %v327, %v379
    %v396 = vadd.f32 %v328, %v380
    %v397 = vadd.f32 %v329, %v381
    %v398 = vadd.f32 %v330, %v382
    %v399 = vadd.f32 %v331, %v383
    %v400 = vadd.f32 %v332, %v384
    %v401 = vadd.f32 %v333, %v385
    %v402 = vadd.f32 %v334, %v386
    %v403 = vadd.f32 %v335, %v387
    %v404 = vlaneseq
    %v405 = vshrl.u32 %v404, 7
    %v406 = vsub.s32 5, %v405
    %v407 = vrot.slane %v63, %v406
    %vm408 = vcmp.eq.s32.totalorder %v407, %v47
    %vm409 = vcmp.eq.s32.totalorder %v407, %v48
    %vm410 = vcmp.eq.s32.totalorder %v407, %v49
    %vm411 = vcmp.eq.s32.totalorder %v407, %v50
    %vm412 = vcmp.eq.s32.totalorder %v407, %v51
    %vm413 = vcmp.eq.s32.totalorder %v407, %v52
    %vm414 = vcmp.eq.s32.totalorder %v407, %v53
    %vm415 = vcmp.eq.s32.totalorder %v407, %v54
    %vm416 = vcmp.eq.s32.totalorder %v407, %v55
    %vm417 = vcmp.eq.s32.totalorder %v407, %v56
    %vm418 = vcmp.eq.s32.totalorder %v407, %v57
    %vm419 = vcmp.eq.s32.totalorder %v407, %v58
    %vm420 = vcmp.eq.s32.totalorder %v407, %v59
    %vm421 = vcmp.eq.s32.totalorder %v407, %v60
    %vm422 = vcmp.eq.s32.totalorder %v407, %v61
    %vm423 = vcmp.eq.s32.totalorder %v407, %v62
    %v424 = vsel %vm408, 1, 0
    %v425 = vsel %vm409, 1, 0
    %v426 = vsel %vm410, 1, 0
    %v427 = vsel %vm411, 1, 0
    %v428 = vsel %vm412, 1, 0
    %v429 = vsel %vm413, 1, 0
    %v430 = vsel %vm414, 1, 0
    %v431 = vsel %vm415, 1, 0
    %v432 = vsel %vm416, 1, 0
    %v433 = vsel %vm417, 1, 0
    %v434 = vsel %vm418, 1, 0
    %v435 = vsel %vm419, 1, 0
    %v436 = vsel %vm420, 1, 0
    %v437 = vsel %vm421, 1, 0
    %v438 = vsel %vm422, 1, 0
    %v439 = vsel %vm423, 1, 0
    %v440 = vcvt.s32.f32 %v424
    %v441 = vcvt.s32.f32 %v425
    %v442 = vcvt.s32.f32 %v426
    %v443 = vcvt.s32.f32 %v427
    %v444 = vcvt.s32.f32 %v428
    %v445 = vcvt.s32.f32 %v429
    %v446 = vcvt.s32.f32 %v430
    %v447 = vcvt.s32.f32 %v431
    %v448 = vcvt.s32.f32 %v432
    %v449 = vcvt.s32.f32 %v433
    %v450 = vcvt.s32.f32 %v434
    %v451 = vcvt.s32.f32 %v435
    %v452 = vcvt.s32.f32 %v436
    %v453 = vcvt.s32.f32 %v437
    %v454 = vcvt.s32.f32 %v438
    %v455 = vcvt.s32.f32 %v439
    %v456 = vadd.f32 %v388, %v440
    %v457 = vadd.f32 %v389, %v441
    %v458 = vadd.f32 %v390, %v442
    %v459 = vadd.f32 %v391, %v443
    %v460 = vadd.f32 %v392, %v444
    %v461 = vadd.f32 %v393, %v445
    %v462 = vadd.f32 %v394, %v446
    %v463 = vadd.f32 %v395, %v447
    %v464 = vadd.f32 %v396, %v448
    %v465 = vadd.f32 %v397, %v449
    %v466 = vadd.f32 %v398, %v450
    %v467 = vadd.f32 %v399, %v451
    %v468 = vadd.f32 %v400, %v452
    %v469 = vadd.f32 %v401, %v453
    %v470 = vadd.f32 %v402, %v454
    %v471 = vadd.f32 %v403, %v455
    %v472 = vlaneseq
    %v473 = vshrl.u32 %v472, 7
    %v474 = vsub.s32 6, %v473
    %v475 = vrot.slane %v63, %v474
    %vm476 = vcmp.eq.s32.totalorder %v475, %v47
    %vm477 = vcmp.eq.s32.totalorder %v475, %v48
    %vm478 = vcmp.eq.s32.totalorder %v475, %v49
    %vm479 = vcmp.eq.s32.totalorder %v475, %v50
    %vm480 = vcmp.eq.s32.totalorder %v475, %v51
    %vm481 = vcmp.eq.s32.totalorder %v475, %v52
    %vm482 = vcmp.eq.s32.totalorder %v475, %v53
    %vm483 = vcmp.eq.s32.totalorder %v475, %v54
    %vm484 = vcmp.eq.s32.totalorder %v475, %v55
    %vm485 = vcmp.eq.s32.totalorder %v475, %v56
    %vm486 = vcmp.eq.s32.totalorder %v475, %v57
    %vm487 = vcmp.eq.s32.totalorder %v475, %v58
    %vm488 = vcmp.eq.s32.totalorder %v475, %v59
    %vm489 = vcmp.eq.s32.totalorder %v475, %v60
    %vm490 = vcmp.eq.s32.totalorder %v475, %v61
    %vm491 = vcmp.eq.s32.totalorder %v475, %v62
    %v492 = vsel %vm476, 1, 0
    %v493 = vsel %vm477, 1, 0
    %v494 = vsel %vm478, 1, 0
    %v495 = vsel %vm479, 1, 0
    %v496 = vsel %vm480, 1, 0
    %v497 = vsel %vm481, 1, 0
    %v498 = vsel %vm482, 1, 0
    %v499 = vsel %vm483, 1, 0
    %v500 = vsel %vm484, 1, 0
    %v501 = vsel %vm485, 1, 0
    %v502 = vsel %vm486, 1, 0
    %v503 = vsel %vm487, 1, 0
    %v504 = vsel %vm488, 1, 0
    %v505 = vsel %vm489, 1, 0
    %v506 = vsel %vm490, 1, 0
    %v507 = vsel %vm491, 1, 0
    %v508 = vcvt.s32.f32 %v492
    %v509 = vcvt.s32.f32 %v493
    %v510 = vcvt.s32.f32 %v494
    %v511 = vcvt.s32.f32 %v495
    %v512 = vcvt.s32.f32 %v496
    %v513 = vcvt.s32.f32 %v497
    %v514 = vcvt.s32.f32 %v498
    %v515 = vcvt.s32.f32 %v499
    %v516 = vcvt.s32.f32 %v500
    %v517 = vcvt.s32.f32 %v501
    %v518 = vcvt.s32.f32 %v502
    %v519 = vcvt.s32.f32 %v503
    %v520 = vcvt.s32.f32 %v504
    %v521 = vcvt.s32.f32 %v505
    %v522 = vcvt.s32.f32 %v506
    %v523 = vcvt.s32.f32 %v507
    %v524 = vadd.f32 %v456, %v508
    %v525 = vadd.f32 %v457, %v509
    %v526 = vadd.f32 %v458, %v510
    %v527 = vadd.f32 %v459, %v511
    %v528 = vadd.f32 %v460, %v512
    %v529 = vadd.f32 %v461, %v513
    %v530 = vadd.f32 %v462, %v514
    %v531 = vadd.f32 %v463, %v515
    %v532 = vadd.f32 %v464, %v516
    %v533 = vadd.f32 %v465, %v517
    %v534 = vadd.f32 %v466, %v518
    %v535 = vadd.f32 %v467, %v519
    %v536 = vadd.f32 %v468, %v520
    %v537 = vadd.f32 %v469, %v521
    %v538 = vadd.f32 %v470, %v522
    %v539 = vadd.f32 %v471, %v523
    %v540 = vlaneseq
    %v541 = vshrl.u32 %v540, 7
    %v542 = vsub.s32 7, %v541
    %v543 = vrot.slane %v63, %v542
    %vm544 = vcmp.eq.s32.totalorder %v543, %v47
    %vm545 = vcmp.eq.s32.totalorder %v543, %v48
    %vm546 = vcmp.eq.s32.totalorder %v543, %v49
    %vm547 = vcmp.eq.s32.totalorder %v543, %v50
    %vm548 = vcmp.eq.s32.totalorder %v543, %v51
    %vm549 = vcmp.eq.s32.totalorder %v543, %v52
    %vm550 = vcmp.eq.s32.totalorder %v543, %v53
    %vm551 = vcmp.eq.s32.totalorder %v543, %v54
    %vm552 = vcmp.eq.s32.totalorder %v543, %v55
    %vm553 = vcmp.eq.s32.totalorder %v543, %v56
    %vm554 = vcmp.eq.s32.totalorder %v543, %v57
    %vm555 = vcmp.eq.s32.totalorder %v543, %v58
    %vm556 = vcmp.eq.s32.totalorder %v543, %v59
    %vm557 = vcmp.eq.s32.totalorder %v543, %v60
    %vm558 = vcmp.eq.s32.totalorder %v543, %v61
    %vm559 = vcmp.eq.s32.totalorder %v543, %v62
    %v560 = vsel %vm544, 1, 0
    %v561 = vsel %vm545, 1, 0
    %v562 = vsel %vm546, 1, 0
    %v563 = vsel %vm547, 1, 0
    %v564 = vsel %vm548, 1, 0
    %v565 = vsel %vm549, 1, 0
    %v566 = vsel %vm550, 1, 0
    %v567 = vsel %vm551, 1, 0
    %v568 = vsel %vm552, 1, 0
    %v569 = vsel %vm553, 1, 0
    %v570 = vsel %vm554, 1, 0
    %v571 = vsel %vm555, 1, 0
    %v572 = vsel %vm556, 1, 0
    %v573 = vsel %vm557, 1, 0
    %v574 = vsel %vm558, 1, 0
    %v575 = vsel %vm559, 1, 0
    %v576 = vcvt.s32.f32 %v560
    %v577 = vcvt.s32.f32 %v561
    %v578 = vcvt.s32.f32 %v562
    %v579 = vcvt.s32.f32 %v563
    %v580 = vcvt.s32.f32 %v564
    %v581 = vcvt.s32.f32 %v565
    %v582 = vcvt.s32.f32 %v566
    %v583 = vcvt.s32.f32 %v567
    %v584 = vcvt.s32.f32 %v568
    %v585 = vcvt.s32.f32 %v569
    %v586 = vcvt.s32.f32 %v570
    %v587 = vcvt.s32.f32 %v571
    %v588 = vcvt.s32.f32 %v572
    %v589 = vcvt.s32.f32 %v573
    %v590 = vcvt.s32.f32 %v574
    %v591 = vcvt.s32.f32 %v575
    %v592 = vadd.f32 %v524, %v576
    %v593 = vadd.f32 %v525, %v577
    %v594 = vadd.f32 %v526, %v578
    %v595 = vadd.f32 %v527, %v579
    %v596 = vadd.f32 %v528, %v580
    %v597 = vadd.f32 %v529, %v581
    %v598 = vadd.f32 %v530, %v582
    %v599 = vadd.f32 %v531, %v583
    %v600 = vadd.f32 %v532, %v584
    %v601 = vadd.f32 %v533, %v585
    %v602 = vadd.f32 %v534, %v586
    %v603 = vadd.f32 %v535, %v587
    %v604 = vadd.f32 %v536, %v588
    %v605 = vadd.f32 %v537, %v589
    %v606 = vadd.f32 %v538, %v590
    %v607 = vadd.f32 %v539, %v591
    %v608 = vld [vmem:[#allocation2] sm:$0xff]
    %v609 = vld [vmem:[#allocation2 + $0x8] sm:$0xff]
    %v610 = vld [vmem:[#allocation2 + $0x10] sm:$0xff]
    %v611 = vld [vmem:[#allocation2 + $0x18] sm:$0xff]
    %v612 = vld [vmem:[#allocation2 + $0x20] sm:$0xff]
    %v613 = vld [vmem:[#allocation2 + $0x28] sm:$0xff]
    %v614 = vld [vmem:[#allocation2 + $0x30] sm:$0xff]
    %v615 = vld [vmem:[#allocation2 + $0x38] sm:$0xff]
    %v616 = vld [vmem:[#allocation2 + $0x40] sm:$0xff]
    %v617 = vld [vmem:[#allocation2 + $0x48] sm:$0xff]
    %v618 = vld [vmem:[#allocation2 + $0x50] sm:$0xff]
    %v619 = vld [vmem:[#allocation2 + $0x58] sm:$0xff]
    %v620 = vld [vmem:[#allocation2 + $0x60] sm:$0xff]
    %v621 = vld [vmem:[#allocation2 + $0x68] sm:$0xff]
    %v622 = vld [vmem:[#allocation2 + $0x70] sm:$0xff]
    %v623 = vld [vmem:[#allocation2 + $0x78] sm:$0xff]
    %624 = vxpose.xlu0.b32.start [1/16] %v592, 128
    %625 = vxpose.xlu0.b32.cont [2/16] %v593, 128
    %626 = vxpose.xlu0.b32.cont [3/16] %v594, 128
    %627 = vxpose.xlu0.b32.cont [4/16] %v595, 128
    %628 = vxpose.xlu0.b32.cont [5/16] %v596, 128
    %629 = vxpose.xlu0.b32.cont [6/16] %v597, 128
    %630 = vxpose.xlu0.b32.cont [7/16] %v598, 128
    %631 = vxpose.xlu0.b32.cont [8/16] %v599, 128
    %632 = vxpose.xlu0.b32.cont [9/16] %v600, 128
    %633 = vxpose.xlu0.b32.cont [10/16] %v601, 128
    %634 = vxpose.xlu0.b32.cont [11/16] %v602, 128
    %635 = vxpose.xlu0.b32.cont [12/16] %v603, 128
    %636 = vxpose.xlu0.b32.cont [13/16] %v604, 128
    %637 = vxpose.xlu0.b32.cont [14/16] %v605, 128
    %638 = vxpose.xlu0.b32.cont [15/16] %v606, 128
    %639 = vxpose.xlu0.b32.end [16/16] %v607, 128
    %v640 = vpop.trf.xlu0
    %v641 = vpop.trf.xlu0
    %v642 = vpop.trf.xlu0
    %v643 = vpop.trf.xlu0
    %v644 = vpop.trf.xlu0
    %v645 = vpop.trf.xlu0
    %v646 = vpop.trf.xlu0
    %v647 = vpop.trf.xlu0
    %v648 = vpop.trf.xlu0
    %v649 = vpop.trf.xlu0
    %v650 = vpop.trf.xlu0
    %v651 = vpop.trf.xlu0
    %v652 = vpop.trf.xlu0
    %v653 = vpop.trf.xlu0
    %v654 = vpop.trf.xlu0
    %v655 = vpop.trf.xlu0
    %656 = vmatprep.subr.mxu0 0.0
    %657 = vmatpush1.msra.mxu0 %v608
    %658 = vmatprep.subr.mxu0 0.0
    %659 = vmatpush1.msra.mxu0 %v609
    %660 = vmatprep.subr.mxu0 0.0
    %661 = vmatpush1.msra.mxu0 %v610
    %662 = vmatprep.subr.mxu0 0.0
    %663 = vmatpush1.msra.mxu0 %v611
    %664 = vmatprep.subr.mxu0 0.0
    %665 = vmatpush1.msra.mxu0 %v612
    %666 = vmatprep.subr.mxu0 0.0
    %667 = vmatpush1.msra.mxu0 %v613
    %668 = vmatprep.subr.mxu0 0.0
    %669 = vmatpush1.msra.mxu0 %v614
    %670 = vmatprep.subr.mxu0 0.0
    %671 = vmatpush1.msra.mxu0 %v615
    %672 = vmatprep.subr.mxu0 0.0
    %673 = vmatpush1.msra.mxu0 %v616
    %674 = vmatprep.subr.mxu0 0.0
    %675 = vmatpush1.msra.mxu0 %v617
    %676 = vmatprep.subr.mxu0 0.0
    %677 = vmatpush1.msra.mxu0 %v618
    %678 = vmatprep.subr.mxu0 0.0
    %679 = vmatpush1.msra.mxu0 %v619
    %680 = vmatprep.subr.mxu0 0.0
    %681 = vmatpush1.msra.mxu0 %v620
    %682 = vmatprep.subr.mxu0 0.0
    %683 = vmatpush1.msra.mxu0 %v621
    %684 = vmatprep.subr.mxu0 0.0
    %685 = vmatpush1.msra.mxu0 %v622
    %686 = vmatprep.subr.mxu0 0.0
    %687 = vmatpush1.msra.mxu0 %v623
    %688 = vmatprep.subr.mxu0 0.0
    %689 = vmatpush1.msra.mxu0 0.0
    %690 = vmatprep.subr.mxu0 0.0
    %691 = vmatpush1.msra.mxu0 0.0
    %692 = vmatprep.subr.mxu0 0.0
    %693 = vmatpush1.msra.mxu0 0.0
    %694 = vmatprep.subr.mxu0 0.0
    %695 = vmatpush1.msra.mxu0 0.0
    %696 = vmatprep.subr.mxu0 0.0
    %697 = vmatpush1.msra.mxu0 0.0
    %698 = vmatprep.subr.mxu0 0.0
    %699 = vmatpush1.msra.mxu0 0.0
    %700 = vmatprep.subr.mxu0 0.0
    %701 = vmatpush1.msra.mxu0 0.0
    %702 = vmatprep.subr.mxu0 0.0
    %703 = vmatpush1.msra.mxu0 0.0
    %704 = vmatprep.subr.mxu0 0.0
    %705 = vmatpush1.msra.mxu0 0.0
    %706 = vmatprep.subr.mxu0 0.0
    %707 = vmatpush1.msra.mxu0 0.0
    %708 = vmatprep.subr.mxu0 0.0
    %709 = vmatpush1.msra.mxu0 0.0
    %710 = vmatprep.subr.mxu0 0.0
    %711 = vmatpush1.msra.mxu0 0.0
    %712 = vmatprep.subr.mxu0 0.0
    %713 = vmatpush1.msra.mxu0 0.0
    %714 = vmatprep.subr.mxu0 0.0
    %715 = vmatpush1.msra.mxu0 0.0
    %716 = vmatprep.subr.mxu0 0.0
    %717 = vmatpush1.msra.mxu0 0.0
    %718 = vmatprep.subr.mxu0 0.0
    %719 = vmatpush1.msra.mxu0 0.0
    %720 = vmatprep.mubr.f32.mxu0 0.0
    %721 = vmatmul.mubr.f32.gmra.mrb[0].mxu0 %v640
    %v722 = vpop.f32.mrb[0].mxu0
    %v723 = vadd.f32 0.0, %v722
    %v724 = vpop.f32.mrb[0].mxu0
    %725 = vdwg.mxu0
    %v726 = vmul.f32 %v723, 0.125
    %v727 = vld [vmem:[#allocation5] sm:$0xff]
    %v728 = vld [vmem:[#allocation5 + $0x8] sm:$0xff]
    %v729 = vld [vmem:[#allocation5 + $0x10] sm:$0xff]
    %v730 = vld [vmem:[#allocation5 + $0x18] sm:$0xff]
    %v731 = vld [vmem:[#allocation5 + $0x20] sm:$0xff]
    %v732 = vld [vmem:[#allocation5 + $0x28] sm:$0xff]
    %v733 = vld [vmem:[#allocation5 + $0x30] sm:$0xff]
    %v734 = vld [vmem:[#allocation5 + $0x38] sm:$0xff]
    %v735 = vld [vmem:[#allocation5 + $0x40] sm:$0xff]
    %v736 = vld [vmem:[#allocation5 + $0x48] sm:$0xff]
    %v737 = vld [vmem:[#allocation5 + $0x50] sm:$0xff]
    %v738 = vld [vmem:[#allocation5 + $0x58] sm:$0xff]
    %v739 = vld [vmem:[#allocation5 + $0x60] sm:$0xff]
    %v740 = vld [vmem:[#allocation5 + $0x68] sm:$0xff]
    %v741 = vld [vmem:[#allocation5 + $0x70] sm:$0xff]
    %v742 = vld [vmem:[#allocation5 + $0x78] sm:$0xff]
    %v743 = vld [vmem:[%s3] sm:$0x1]
    %v745 = vlaneseq
    %v746 = vshrl.u32 %v745, 7
    %v747 = vsub.s32 0, %v746
    %v748 = vrot.slane %v743, %v747
    %750 = vmatprep.subr.mxu0 0.0
    %751 = vmatpush1.msra.mxu0 %v727
    %752 = vmatprep.subr.mxu0 0.0
    %753 = vmatpush1.msra.mxu0 %v728
    %754 = vmatprep.subr.mxu0 0.0
    %755 = vmatpush1.msra.mxu0 %v729
    %756 = vmatprep.subr.mxu0 0.0
    %757 = vmatpush1.msra.mxu0 %v730
    %758 = vmatprep.subr.mxu0 0.0
    %759 = vmatpush1.msra.mxu0 %v731
    %760 = vmatprep.subr.mxu0 0.0
    %761 = vmatpush1.msra.mxu0 %v732
    %762 = vmatprep.subr.mxu0 0.0
    %763 = vmatpush1.msra.mxu0 %v733
    %764 = vmatprep.subr.mxu0 0.0
    %765 = vmatpush1.msra.mxu0 %v734
    %766 = vmatprep.subr.mxu0 0.0
    %767 = vmatpush1.msra.mxu0 %v735
    %768 = vmatprep.subr.mxu0 0.0
    %769 = vmatpush1.msra.mxu0 %v736
    %770 = vmatprep.subr.mxu0 0.0
    %771 = vmatpush1.msra.mxu0 %v737
    %772 = vmatprep.subr.mxu0 0.0
    %773 = vmatpush1.msra.mxu0 %v738
    %774 = vmatprep.subr.mxu0 0.0
    %775 = vmatpush1.msra.mxu0 %v739
    %776 = vmatprep.subr.mxu0 0.0
    %777 = vmatpush1.msra.mxu0 %v740
    %778 = vmatprep.subr.mxu0 0.0
    %779 = vmatpush1.msra.mxu0 %v741
    %780 = vmatprep.subr.mxu0 0.0
    %781 = vmatpush1.msra.mxu0 %v742
    %782 = vmatprep.subr.mxu0 0.0
    %783 = vmatpush1.msra.mxu0 0.0
    %784 = vmatprep.subr.mxu0 0.0
    %785 = vmatpush1.msra.mxu0 0.0
    %786 = vmatprep.subr.mxu0 0.0
    %787 = vmatpush1.msra.mxu0 0.0
    %788 = vmatprep.subr.mxu0 0.0
    %789 = vmatpush1.msra.mxu0 0.0
    %790 = vmatprep.subr.mxu0 0.0
    %791 = vmatpush1.msra.mxu0 0.0
    %792 = vmatprep.subr.mxu0 0.0
    %793 = vmatpush1.msra.mxu0 0.0
    %794 = vmatprep.subr.mxu0 0.0
    %795 = vmatpush1.msra.mxu0 0.0
    %796 = vmatprep.subr.mxu0 0.0
    %797 = vmatpush1.msra.mxu0 0.0
    %798 = vmatprep.subr.mxu0 0.0
    %799 = vmatpush1.msra.mxu0 0.0
    %800 = vmatprep.subr.mxu0 0.0
    %801 = vmatpush1.msra.mxu0 0.0
    %802 = vmatprep.subr.mxu0 0.0
    %803 = vmatpush1.msra.mxu0 0.0
    %804 = vmatprep.subr.mxu0 0.0
    %805 = vmatpush1.msra.mxu0 0.0
    %806 = vmatprep.subr.mxu0 0.0
    %807 = vmatpush1.msra.mxu0 0.0
    %808 = vmatprep.subr.mxu0 0.0
    %809 = vmatpush1.msra.mxu0 0.0
    %810 = vmatprep.subr.mxu0 0.0
    %811 = vmatpush1.msra.mxu0 0.0
    %812 = vmatprep.subr.mxu0 0.0
    %813 = vmatpush1.msra.mxu0 0.0
    %814 = vmatprep.mubr.f32.mxu0 0.0
    %815 = vmatmul.mubr.f32.gmra.mrb[0].mxu0 %v726
    %v816 = vpop.f32.mrb[0].mxu0
    %v817 = vadd.f32 %v748, %v816
    %v818 = vpop.f32.mrb[0].mxu0
    %819 = vdwg.mxu0
    %820 = vst [vmem:[#allocation7] sm:$0x3] %v817
    // Predicated region
    $region26: #{tpu_custom_call.1} parent=1 // pred_check
      _
    $region27: #{tpu_custom_call.1} parent=1 // pred_check_branch
      %822 = sbr.rel (0) target = $region29
    $region28: #{tpu_custom_call.1} parent=1 // pred_region
      %s824 = ssub.s32 32, 32
      %825 = vsyncadd [#allocation4], %s824
      %s827 = sshll.u32 [#allocation7], 4
      %s828 = int_to_ptr.vmem [resolvable:$true] %s827
      %830 = dma.vmem_to_hbm [thread:$0]  %s828, 32, %s4, [#allocation4]
    $region29: #{tpu_custom_call.1} parent=1 // pred_fallthru
      _
    // Predicated region
    $region30: #{tpu_custom_call.1} parent=1 // pred_check
      _
    $region31: #{tpu_custom_call.1} parent=1 // pred_check_branch
      %832 = sbr.rel (0) target = $region33
    $region32: #{tpu_custom_call.1} parent=1 // pred_region
      %833 = dma.done [#allocation4], 32
    $region33: #{tpu_custom_call.1} parent=1 // pred_fallthru
      _
    %834 = vsyncpa [#allocation3], 1
    %835 = vsyncpa [#allocation6], 1
    %836 = vsyncpa [#allocation4], 1

</llo_original>
